<compile_context>
chip_gen: v7x
topology: tpu7x:2x2x1
jax: 0.10.0
libtpu: 0.0.40
codegen_flags: <defaults>
</compile_context>

<pallas_src>
import jax
import jax.numpy as jnp
from jax.experimental import pallas as pl
from jax.experimental.pallas import tpu as pltpu
import numpy as np


# ----------------------------------------------------------------------------
# Pallas kernel: o = neg_coeff * g   (neg_coeff is an f32 scalar in SMEM)
# ----------------------------------------------------------------------------
def _neg_scale_kernel(neg_coeff_ref, g_ref, o_ref):
    nc = neg_coeff_ref[0]  # f32 scalar from SMEM
    # Multiply in f32 (exact coeff even for bf16 grads), cast back to grad dtype.
    o_ref[...] = (nc * g_ref[...].astype(jnp.float32)).astype(o_ref.dtype)


# ----------------------------------------------------------------------------
# Chip-dependent tuning.
# ----------------------------------------------------------------------------
_WIDE_LANES = 2048          # wide, unmasked lane-dense stores; multiple of 128
_MIB = 1024 * 1024


def _chip_tuning():
    """Returns (tile_bytes, vmem_limit_bytes, multi_tc)."""
    try:
        kind = jax.devices()[0].device_kind.lower()
    except Exception:  # pragma: no cover - defensive
        kind = ""
    if "v7" in kind or "7x" in kind:
        # v7x: 3.2 TB/s HBM -> bigger tiles to amortize per-step overhead;
        # 64 MiB physical VMEM per TC; 2 TensorCores per chip.
        return 6 * _MIB, 40 * _MIB, True
    if "v6" in kind:
        # v6e: ~4 MiB tile sits in the ~85-90% of roofline regime.
        return 4 * _MIB, 32 * _MIB, False
    # v5e and unknown chips: conservative (820 GB/s HBM, 16 MiB scoped default).
    return 2 * _MIB, 24 * _MIB, False


def _round_up(x, m):
    return (x + m - 1) // m * m


# ----------------------------------------------------------------------------
# Wrapper: flatten -> lane-dense slab -> tiled pallas_call -> reshape back.
# ----------------------------------------------------------------------------
def _neg_scale_pallas(coeff, g):
    orig_shape = g.shape
    orig_dtype = g.dtype
    n = int(np.prod(orig_shape)) if len(orig_shape) else 1
    if n == 0:
        return g  # empty gradient: nothing to scale

    itemsize = jnp.dtype(orig_dtype).itemsize
    sub = 8 if itemsize >= 4 else (32 // itemsize)  # sublane granularity (16 bf16, 32 int8)

    # Lane width: wide for real workloads, minimum 128 for tiny arrays.
    lanes = _WIDE_LANES if n >= _WIDE_LANES * sub else 128
    rows = pl.cdiv(n, lanes)
    rows_padded = _round_up(rows, sub)          # sublane alignment ONLY (no block round-up)

    tile_bytes, vmem_limit, multi_tc = _chip_tuning()

    # Rows per tile: ~tile_bytes of gradient, multiple of the sublane granularity.
    block_rows = max(sub, (tile_bytes // (lanes * itemsize)) // sub * sub)
    if block_rows >= rows_padded:
        if multi_tc and rows_padded > sub:
            # v7x: make at least 2 grid steps so both TensorCores get work.
            block_rows = _round_up(pl.cdiv(rows_padded, 2), sub)
        else:
            block_rows = rows_padded
    grid = (pl.cdiv(rows_padded, block_rows),)  # last block may be partial (masked writes)

    n_slab = rows_padded * lanes
    flat = g.reshape(-1)
    if n_slab != n:
        # Small tail pad (at most sub*lanes - 1 elements) only when misaligned;
        # most gradient shapes hit the no-pad path.
        flat = jnp.pad(flat, (0, n_slab - n))
    g2 = flat.reshape(rows_padded, lanes)

    # Hoist the negation out of the kernel; keep the scalar in f32 SMEM.
    neg_c = (-jnp.asarray(coeff, dtype=jnp.float32)).reshape((1,))

    out2 = pl.pallas_call(
        _neg_scale_kernel,
        out_shape=jax.ShapeDtypeStruct((rows_padded, lanes), orig_dtype),
        grid=grid,
        in_specs=[
            pl.BlockSpec(memory_space=pltpu.MemorySpace.SMEM),    # neg_coeff (1,) f32
            pl.BlockSpec((block_rows, lanes), lambda i: (i, 0)),  # grad tile
        ],
        out_specs=pl.BlockSpec((block_rows, lanes), lambda i: (i, 0)),
        input_output_aliases={1: 0},  # overwrite the dead cotangent slab in place
        compiler_params=pltpu.CompilerParams(
            dimension_semantics=("parallel",),
            vmem_limit_bytes=vmem_limit,
        ),
    )(neg_c, g2)

    out = out2.reshape(-1)
    if n_slab != n:
        out = out[:n]
    return out.reshape(orig_shape)


# ----------------------------------------------------------------------------
# GradientReverseLayer equivalent: identity forward, -coeff * g backward.
# coeff is a traced f32 scalar carried through residuals -> no per-step
# recompilation as the schedule advances.
# ----------------------------------------------------------------------------
@jax.custom_vjp
def gradient_reverse(coeff, x):
    del coeff
    return x  # pure identity: no kernel, no HBM traffic


def _gradient_reverse_fwd(coeff, x):
    return x, coeff


def _gradient_reverse_bwd(coeff, g):
    # coeff gets a zero cotangent (PyTorch returns None for it).
    return (jnp.zeros_like(coeff), _neg_scale_pallas(coeff, g))


gradient_reverse.defvjp(_gradient_reverse_fwd, _gradient_reverse_bwd)


# ----------------------------------------------------------------------------
# GradientReverseModule equivalent (host-side stateful wrapper).
# ----------------------------------------------------------------------------
def aToBScheduler(step, a, b, gamma=10.0, max_iter=10000.0):
    """Standard DANN-style a->b sigmoid schedule."""
    ans = a + (b - a) * (2.0 / (1.0 + np.exp(-gamma * step / max_iter)) - 1.0)
    return float(ans)


class GradientReverseModule:
    # TODO(synk): global_step/coeff bookkeeping stays as host-side Python state
    # (PyTorch keeps it as a registered buffer); if this call site is captured
    # inside a jitted train step, pass coeff in explicitly as a device scalar
    # each step instead of relying on this host-side scheduler tick.
    def __init__(self, scheduler):
        self.scheduler = scheduler
        self.global_step = 0.0
        self.coeff = 0.0
        self.training = True

    def __call__(self, x):
        self.coeff = float(self.scheduler(self.global_step))
        if self.training:
            self.global_step += 1.0
        # Pass coeff as a device f32 scalar so changing values never retrace.
        return gradient_reverse(jnp.float32(self.coeff), x)


# ----------------------------------------------------------------------------
# Demo / self-test
# ----------------------------------------------------------------------------
if __name__ == "__main__":
    key = jax.random.PRNGKey(0)
    # NCHW input, small shape matching the module's typical usage.
    x = jax.random.normal(key, (2, 4, 16, 16), dtype=jnp.float32)

    grl = GradientReverseModule(
        lambda step: aToBScheduler(step, 0.0, 1.0, gamma=10.0, max_iter=10000.0)
    )

    # Tick the schedule once, then exercise forward + backward.
    y0 = grl(x)
    jax.block_until_ready(y0)

    coeff_used = float(grl.scheduler(grl.global_step))  # coeff the next call will use

    def loss_fn(inp):
        return jnp.sum(grl(inp))  # identity forward, Pallas-reversed backward

    y, vjp_fn = jax.vjp(loss_fn, x)
    (dx,) = vjp_fn(jnp.float32(1.0))
    jax.block_until_ready(dx)

    # Forward is exact identity.
    y_full = grl(x)
    jax.block_until_ready(y_full)
    np.testing.assert_allclose(np.asarray(y_full), np.asarray(x), rtol=0, atol=0)
    # Backward is -coeff * g.
    np.testing.assert_allclose(
        np.asarray(dx),
        -coeff_used * np.ones_like(np.asarray(x)),
        rtol=1e-6,
        atol=1e-6,
    )

    # Extra backward-kernel checks:
    #   * non-128-aligned (small tail pad path)
    #   * multi-tile wide-lane grid whose last block is partial (no full-block pad)
    #   * 4 MiB aligned slab
    #   * bf16 grads (f32 multiply then cast)
    for shape, dtype in [
        ((3, 5, 7, 11), jnp.float32),       # 1155 elems -> tail pad, grid=1
        ((3, 256, 32, 32), jnp.float32),    # 3 MiB -> 2048 lanes, partial last block
        ((1, 16, 256, 256), jnp.float32),   # 4 MiB -> aligned multi-tile slab
        ((2, 8, 64, 64), jnp.bfloat16),     # bf16 path
    ]:
        g = jax.random.normal(jax.random.PRNGKey(1), shape).astype(dtype)
        got = _neg_scale_pallas(jnp.float32(0.37), g)
        jax.block_until_ready(got)
        ref = (jnp.float32(-0.37) * g.astype(jnp.float32)).astype(dtype)
        np.testing.assert_allclose(
            np.asarray(got, dtype=np.float32),
            np.asarray(ref, dtype=np.float32),
            rtol=1e-6,
            atol=1e-6,
        )

    print("KERNEL_OK")
</pallas_src>

<mosaic_0001>
module attributes {stable_mosaic.version = 11 : i64} {
  func.func @_neg_scale_kernel(%arg0: i32, %arg1: memref<1xf32, #tpu.memory_space<smem>>, %arg2: memref<16x128xf32, #tpu.memory_space<vmem>>, %arg3: memref<16x128xf32, #tpu.memory_space<vmem>>) attributes {dimension_semantics = [#tpu.dimension_semantics<parallel>], iteration_bounds = array<i64: 1>, scalar_prefetch = 0 : i64, scratch_operands = 0 : i64, tpu.core_type = #tpu.core_type<tc>, window_params = [{transform_indices = @transform_0, window_bounds = array<i64: 1>}, {transform_indices = @transform_1, window_bounds = array<i64: 16, 128>}, {transform_indices = @transform_2, window_bounds = array<i64: 16, 128>}]} {
    %c0 = arith.constant 0 : index
    %0 = memref.load %arg1[%c0] : memref<1xf32, #tpu.memory_space<smem>>
    %c0_0 = arith.constant 0 : index
    %c0_1 = arith.constant 0 : index
    %1 = vector.load %arg2[%c0_0, %c0_1] : memref<16x128xf32, #tpu.memory_space<vmem>>, vector<16x128xf32>
    %2 = vector.broadcast %0 : f32 to vector<16x128xf32>
    %3 = arith.mulf %2, %1 : vector<16x128xf32>
    %c0_2 = arith.constant 0 : index
    %c0_3 = arith.constant 0 : index
    %4 = vector.load %arg3[%c0_2, %c0_3] : memref<16x128xf32, #tpu.memory_space<vmem>>, vector<16x128xf32>
    tpu.vector_store %arg3[%c0_2, %c0_3], %3 {strides = array<i32>} : memref<16x128xf32, #tpu.memory_space<vmem>>, vector<16x128xf32>,
    return
  }
  func.func @transform_0(%arg0: i32) -> i32 {
    %c0_i32 = arith.constant 0 : i32
    %c0_i32_0 = arith.constant 0 : i32
    return %c0_i32 : i32
  }
  func.func @transform_1(%arg0: i32) -> (i32, i32) {
    %c0_i32 = arith.constant 0 : i32
    %c0_i32_0 = arith.constant 0 : i32
    return %arg0, %c0_i32 : i32, i32
  }
  func.func @transform_2(%arg0: i32) -> (i32, i32) {
    %c0_i32 = arith.constant 0 : i32
    %c0_i32_0 = arith.constant 0 : i32
    return %arg0, %c0_i32 : i32, i32
  }
}

</mosaic_0001>

<llo_original>
// kernel: tpu_custom_call.1
$region0: #{tpu_custom_call.1}
  #allocation0 [shape = 'u32[]', space=smem, size = 0x4, offset = 0x4, fixed_abs, tag = 'smem constant byte address 0x4 - core index']
  #allocation1 [shape = 'u32[144,128]{1,0:T(1,128)}', space=vmem, size = 0x12000, scoped, tag = 'internal scratch']
  #allocation2 [shape = 'f32[1]{0:T(128)S(6)}', space=smem, size = 0x200, scoped, tag = 'scoped memory for tpu_custom_call.1']
  %s0 = inlined_call_operand.<no memory space> [shape: f32[1], index: 0, kind: input, shape index: {}]
  %s1 = inlined_call_operand.hbm [shape: f32[16,128], index: 1, kind: input, shape index: {}, may-alias: {1,2}]
  %s2 = inlined_call_operand.hbm [shape: f32[16,128], index: 2, kind: output, shape index: {}, may-alias: {1,2}]
  %s3 = sld [smem:[#allocation0]]
  $region22: #{tpu_custom_call.1} parent=0
    _
  %s5 = ssub.s32 1, %s3
  %s6 = scalar_select 0, %s5, %s3
  %7 = sst [smem:[#allocation2]] %s0
  $region1: #{tpu_custom_call.1} parent=0
    #allocation3 [shape = 'u8[8192]{0}', space=vmem, size = 0x2000, scoped, tag = 'input window, operand 1, single buffered']
    #allocation4 [shape = 's32[1]{0}', space=sflag, size = 0x4, scoped, tag = 'scoped memory for tpu_custom_call.1']
    #allocation5 [shape = 's32[1]{0}', space=sflag, size = 0x4, scoped, tag = 'scoped memory for tpu_custom_call.1']
    #allocation6 [shape = 'u8[8192]{0}', space=vmem, size = 0x2000, scoped, tag = 'output window, operand 0, single buffered']
    %8 = vsyncpa [#allocation4], 0
    %9 = vsyncpa [#allocation5], 0
    // Predicated region
    $region2: #{tpu_custom_call.1} parent=1 // pred_check
      _
    $region3: #{tpu_custom_call.1} parent=1 // pred_check_branch
      %11 = sbr.rel (0) target = $region5
    $region4: #{tpu_custom_call.1} parent=1 // pred_region
      _
    $region5: #{tpu_custom_call.1} parent=1 // pred_fallthru
      _
    // Predicated region
    $region6: #{tpu_custom_call.1} parent=1 // pred_check
      _
    $region7: #{tpu_custom_call.1} parent=1 // pred_check_branch
      %13 = sbr.rel (0) target = $region9
    $region8: #{tpu_custom_call.1} parent=1 // pred_region
      %s15 = ssub.s32 256, 256
      %16 = vsyncadd [#allocation4], %s15
      %s17 = sshll.u32 [#allocation3], 4
      %s18 = int_to_ptr.vmem [resolvable:$true] %s17
      %23 = dma.hbm_to_vmem [thread:$0]  %s1, 256, %s18, [#allocation4], 128, 128, 8
    $region9: #{tpu_custom_call.1} parent=1 // pred_fallthru
      _
    // Predicated region
    $region10: #{tpu_custom_call.1} parent=1 // pred_check
      _
    $region11: #{tpu_custom_call.1} parent=1 // pred_check_branch
      %25 = sbr.rel (0) target = $region13
    $region12: #{tpu_custom_call.1} parent=1 // pred_region
      %26 = dma.done [#allocation4], 256
    $region13: #{tpu_custom_call.1} parent=1 // pred_fallthru
      _
    %s27 = sld [smem:[#allocation2]]
    %v28 = vld [vmem:[#allocation3] sm:$0xff]
    %v29 = vld [vmem:[#allocation3 + $0x8] sm:$0xff]
    %v30 = vstv %s27
    %v31 = vmul.f32 %v30, %v28
    %v32 = vmul.f32 %v30, %v29
    %33 = vst [vmem:[#allocation6] sm:$0xff] %v31
    %34 = vst [vmem:[#allocation6 + $0x8] sm:$0xff] %v32
    // Predicated region
    $region14: #{tpu_custom_call.1} parent=1 // pred_check
      _
    $region15: #{tpu_custom_call.1} parent=1 // pred_check_branch
      %36 = sbr.rel (0) target = $region17
    $region16: #{tpu_custom_call.1} parent=1 // pred_region
      %s38 = ssub.s32 256, 256
      %39 = vsyncadd [#allocation5], %s38
      %s40 = sshll.u32 [#allocation6], 4
      %s41 = int_to_ptr.vmem [resolvable:$true] %s40
      %46 = dma.vmem_to_hbm [thread:$0]  %s41, 256, %s2, [#allocation5], 128, 128, 8
    $region17: #{tpu_custom_call.1} parent=1 // pred_fallthru
      _
    // Predicated region
    $region18: #{tpu_custom_call.1} parent=1 // pred_check
      _
    $region19: #{tpu_custom_call.1} parent=1 // pred_check_branch
      %48 = sbr.rel (0) target = $region21
    $region20: #{tpu_custom_call.1} parent=1 // pred_region
      %49 = dma.done [#allocation5], 256
    $region21: #{tpu_custom_call.1} parent=1 // pred_fallthru
      _
    %50 = vsyncpa [#allocation4], 1
    %51 = vsyncpa [#allocation5], 1

</llo_original>
